<compile_context>
chip_gen: v7x
topology: tpu7x:2x2x1
jax: 0.10.0
libtpu: 0.0.40
codegen_flags: <defaults>
</compile_context>

<pallas_src>
import functools

import jax
import jax.numpy as jnp
from jax import lax
from jax.experimental import pallas as pl
from jax.experimental.pallas import tpu as pltpu


def _similarity_kernel(in1_ref, in2_ref, w1_ref, b1_ref, w2_ref, b2_ref,
                       out_ref, prod_acc, n1_acc, n2_acc, *, matmul_dtype):
    s_idx = pl.program_id(1)

    @pl.when(s_idx == 0)
    def _():
        prod_acc[...] = jnp.zeros_like(prod_acc)
        n1_acc[...] = jnp.zeros_like(n1_acc)
        n2_acc[...] = jnp.zeros_like(n2_acc)

    tb, ts, din = in1_ref.shape
    dout = w1_ref.shape[1]
    m = tb * ts

    # Fold (batch, seq) into the MXU M dimension: one big matmul per Linear.
    # (ts is sublane aligned when the S axis is tiled, so this is a re-tiling,
    # not a relayout.)
    x1 = in1_ref[...].reshape(m, din)
    x2 = in2_ref[...].reshape(m, din)
    w1 = w1_ref[...]
    w2 = w2_ref[...]
    if matmul_dtype is not None:
        # bf16 operands + f32 accumulation: f32xf32 on the MXU is multi-pass
        # emulation on all current TPU generations.
        x1 = x1.astype(matmul_dtype)
        x2 = x2.astype(matmul_dtype)
        w1 = w1.astype(matmul_dtype)
        w2 = w2.astype(matmul_dtype)
    e1 = jnp.dot(x1, w1, preferred_element_type=jnp.float32)
    e2 = jnp.dot(x2, w2, preferred_element_type=jnp.float32)
    e1 = e1 + b1_ref[...].astype(jnp.float32)   # (m, dout) + (1, dout)
    e2 = e2 + b2_ref[...].astype(jnp.float32)

    # Per-batch partial reductions over the seq (sublane) axis only.  The
    # d_out (lane) reduce is deferred to the finalize step, so there is no
    # per-step sublane->lane relayout.
    e1 = e1.reshape(tb, ts, dout)
    e2 = e2.reshape(tb, ts, dout)
    prod_acc[...] += jnp.sum(e1 * e2, axis=1)
    n1_acc[...] += jnp.sum(e1 * e1, axis=1)
    n2_acc[...] += jnp.sum(e2 * e2, axis=1)

    @pl.when(s_idx == pl.num_programs(1) - 1)
    def _():
        prod = jnp.sum(prod_acc[...], axis=-1, keepdims=True)
        n1 = jnp.sum(n1_acc[...], axis=-1, keepdims=True)
        n2 = jnp.sum(n2_acc[...], axis=-1, keepdims=True)
        # One EUP rsqrt replaces sqrt + sqrt + divide.  The tiny clamp only
        # guards rsqrt(0) for all-zero embeddings (PyTorch would emit NaN/Inf
        # there); otherwise identical to prod / (||f1|| * ||f2||).
        denom_sq = jnp.maximum(n1 * n2, jnp.float32(1e-30))
        cos = prod * lax.rsqrt(denom_sq)
        out_ref[...] = jnp.broadcast_to(cos, out_ref.shape).astype(out_ref.dtype)


def _round_up(x, m):
    return ((x + m - 1) // m) * m


def _vmem_capacity_bytes(default=64 << 20):
    """Per-core VMEM capacity; conservative (v7x) fallback if unavailable."""
    try:
        info = pltpu.get_tpu_info()
        cap = getattr(info, "vmem_capacity_bytes", None)
        if cap:
            return int(cap)
    except Exception:
        pass
    return default


def similarity_score(in1, in2, w1, b1, w2, b2, *,
                     block_b=None, block_s=None,
                     matmul_dtype=jnp.bfloat16,
                     vmem_limit_bytes=None):
    """in1, in2: (B, S, D_in); w*: (D_in, D_out); b*: (D_out,) -> (B,) cosine."""
    B, S, d_in = in1.shape
    d_out = w1.shape[1]
    in_itemsize = jnp.dtype(in1.dtype).itemsize
    w_itemsize = jnp.dtype(w1.dtype).itemsize

    # ---- per-generation VMEM sizing ----------------------------------------
    vmem_cap = _vmem_capacity_bytes()
    if vmem_limit_bytes is None:
        vmem_limit_bytes = int(vmem_cap * 0.85)     # ~108 MiB on 128 MiB parts,
                                                    # ~54 MiB on v7x's 64 MiB
    budget = int(vmem_limit_bytes * 0.75)           # compiler headroom

    # ---- batch tile (parallel grid axis) ------------------------------------
    # No jnp.pad: the last batch tile may be a partial/edge block; garbage
    # only lands in output rows >= B, which we slice off below.
    if block_b is None:
        if B < 16:
            block_b = B
        else:
            # >=2 tiles so both v7x TensorCores get work; multiple of 8 keeps
            # the (block_b, 128) output block sublane-aligned.
            block_b = min(128, _round_up(pl.cdiv(B, 2), 8))
    block_b = min(block_b, B)
    assert block_b == B or block_b % 8 == 0, \
        "block_b must be a multiple of 8 or equal to B"
    nb = pl.cdiv(B, block_b)

    # ---- seq tile (reduction grid axis), dtype-aware alignment --------------
    s_align = {4: 8, 2: 16, 1: 32}.get(in_itemsize, 8)

    def footprint(bs):
        m = block_b * bs
        stream = 2 * 2 * block_b * bs * d_in * in_itemsize        # in1/in2, 2 bufs each
        casted = (2 * m * d_in * 2) if (matmul_dtype is not None
                                        and in_itemsize > 2) else 0
        inter = 5 * m * d_out * 4                                  # e1,e2,p,s1,s2 (f32)
        weights = 2 * 2 * (d_in * d_out + d_out) * w_itemsize      # 2 layers x 2 bufs
        accs = 3 * block_b * max(d_out, 128) * 4
        outb = 2 * block_b * 128 * 4
        return stream + casted + inter + weights + accs + outb

    if block_s is None:
        cands = [t for t in range(s_align, S + 1, s_align) if S % t == 0]
        if not cands:
            cands = [S]      # awkward S: single tile; correctness preserved
        fitting = [t for t in cands if footprint(t) <= budget]
        # Largest aligned divisor that fits; smallest aligned divisor as a
        # fallback (never silently keep an oversized block_s = S).
        block_s = fitting[-1] if fitting else cands[0]
    assert S % block_s == 0, "block_s must divide S (padding S would bias the sums)"
    ns = S // block_s
    assert ns == 1 or block_s % s_align == 0, \
        "tiled seq blocks must be sublane-aligned for this dtype"

    b1_2d = b1.reshape(1, d_out)
    b2_2d = b2.reshape(1, d_out)

    kernel = functools.partial(_similarity_kernel, matmul_dtype=matmul_dtype)

    out = pl.pallas_call(
        kernel,
        out_shape=jax.ShapeDtypeStruct((B, 128), jnp.float32),
        grid=(nb, ns),
        in_specs=[
            pl.BlockSpec((block_b, block_s, d_in), lambda i, j: (i, j, 0)),
            pl.BlockSpec((block_b, block_s, d_in), lambda i, j: (i, j, 0)),
            pl.BlockSpec((d_in, d_out), lambda i, j: (0, 0)),   # w1 resident
            pl.BlockSpec((1, d_out), lambda i, j: (0, 0)),      # b1 resident
            pl.BlockSpec((d_in, d_out), lambda i, j: (0, 0)),   # w2 resident
            pl.BlockSpec((1, d_out), lambda i, j: (0, 0)),      # b2 resident
        ],
        out_specs=pl.BlockSpec((block_b, 128), lambda i, j: (i, 0)),
        scratch_shapes=[pltpu.VMEM((block_b, d_out), jnp.float32)] * 3,
        compiler_params=pltpu.CompilerParams(
            dimension_semantics=("parallel", "arbitrary"),
            vmem_limit_bytes=vmem_limit_bytes),
    )(in1, in2, w1, b1_2d, w2, b2_2d)

    # Lane-dense (B, 128) slab -> (B,) result.
    return out[:, 0]


def _reference(in1, in2, w1, b1, w2, b2):
    e1 = jnp.einsum("bsd,de->bse", in1, w1) + b1
    e2 = jnp.einsum("bsd,de->bse", in2, w2) + b2
    f1 = e1.reshape(e1.shape[0], -1)
    f2 = e2.reshape(e2.shape[0], -1)
    return jnp.sum(f1 * f2, axis=1) / (
        jnp.linalg.norm(f1, axis=1) * jnp.linalg.norm(f2, axis=1))


if __name__ == "__main__":
    key = jax.random.PRNGKey(0)

    def make_case(k, B, S, d_in, d_out):
        ks = jax.random.split(k, 6)
        bound = 1.0 / (d_in ** 0.5)
        a = jax.random.normal(ks[0], (B, S, d_in), jnp.float32)
        b = jax.random.normal(ks[1], (B, S, d_in), jnp.float32)
        w1 = jax.random.uniform(ks[2], (d_in, d_out), jnp.float32, -bound, bound)
        b1 = jax.random.uniform(ks[3], (d_out,), jnp.float32, -bound, bound)
        w2 = jax.random.uniform(ks[4], (d_in, d_out), jnp.float32, -bound, bound)
        b2 = jax.random.uniform(ks[5], (d_out,), jnp.float32, -bound, bound)
        return a, b, w1, b1, w2, b2

    k1, k2 = jax.random.split(key)

    # Case 1: module's nominal small shapes (single grid step).
    args = make_case(k1, B=2, S=8, d_in=32, d_out=16)
    ref = _reference(*args)

    # 1a: f32 matmul path, bit-tight structural check.
    out = jax.block_until_ready(similarity_score(*args, matmul_dtype=None))
    assert out.shape == (2,)
    assert jnp.allclose(out, ref, rtol=1e-5, atol=1e-5), (out, ref)

    # 1b: default bf16-operand matmul (f32 accumulation) -> looser tolerance.
    out_bf = jax.block_until_ready(similarity_score(*args))
    assert jnp.allclose(out_bf, ref, rtol=2e-2, atol=2e-2), (out_bf, ref)

    # Case 2: exercises the multi-tile grid with a PARTIAL last batch tile
    # (B=20, auto block_b=16 -> nb=2, no jnp.pad) and the S-axis accumulator
    # path (block_s=16 -> ns=4).
    args2 = make_case(k2, B=20, S=64, d_in=128, d_out=16)
    ref2 = _reference(*args2)

    out2 = jax.block_until_ready(
        similarity_score(*args2, block_s=16, matmul_dtype=None))
    assert out2.shape == (20,)
    assert jnp.allclose(out2, ref2, rtol=1e-4, atol=1e-4), (out2, ref2)

    out2_bf = jax.block_until_ready(similarity_score(*args2, block_s=16))
    assert jnp.allclose(out2_bf, ref2, rtol=2e-2, atol=2e-2), (out2_bf, ref2)

    print("KERNEL_OK")
</pallas_src>

<mosaic_0001>
module attributes {stable_mosaic.version = 11 : i64} {
  func.func @_similarity_kernel(%arg0: i32, %arg1: i32, %arg2: memref<2x8x32xf32, #tpu.memory_space<vmem>>, %arg3: memref<2x8x32xf32, #tpu.memory_space<vmem>>, %arg4: memref<32x16xf32, #tpu.memory_space<vmem>>, %arg5: memref<1x16xf32, #tpu.memory_space<vmem>>, %arg6: memref<32x16xf32, #tpu.memory_space<vmem>>, %arg7: memref<1x16xf32, #tpu.memory_space<vmem>>, %arg8: memref<2x128xf32, #tpu.memory_space<vmem>>, %arg9: memref<2x16xf32, #tpu.memory_space<vmem>>, %arg10: memref<2x16xf32, #tpu.memory_space<vmem>>, %arg11: memref<2x16xf32, #tpu.memory_space<vmem>>) attributes {dimension_semantics = [#tpu.dimension_semantics<parallel>, #tpu.dimension_semantics<arbitrary>], iteration_bounds = array<i64: 1, 1>, scalar_prefetch = 0 : i64, scratch_operands = 3 : i64, tpu.core_type = #tpu.core_type<tc>, window_params = [{transform_indices = @transform_0, window_bounds = array<i64: 2, 8, 32>}, {transform_indices = @transform_1, window_bounds = array<i64: 2, 8, 32>}, {pipeline_mode = #tpu.pipeline_mode<synchronous>, transform_indices = @transform_2, window_bounds = array<i64: 32, 16>}, {pipeline_mode = #tpu.pipeline_mode<synchronous>, transform_indices = @transform_3, window_bounds = array<i64: 1, 16>}, {pipeline_mode = #tpu.pipeline_mode<synchronous>, transform_indices = @transform_4, window_bounds = array<i64: 32, 16>}, {pipeline_mode = #tpu.pipeline_mode<synchronous>, transform_indices = @transform_5, window_bounds = array<i64: 1, 16>}, {transform_indices = @transform_6, window_bounds = array<i64: 2, 128>}]} {
    %c0_i32 = arith.constant 0 : i32
    %0 = arith.cmpi eq, %arg1, %c0_i32 : i32
    %1 = arith.extui %0 : i1 to i32
    %c0_i32_0 = arith.constant 0 : i32
    %2 = arith.cmpi ne, %1, %c0_i32_0 : i32
    scf.if %2 {
      %cst_32 = arith.constant 0.000000e+00 : f32
      %37 = vector.broadcast %cst_32 : f32 to vector<2x16xf32>
      %c0_33 = arith.constant 0 : index
      %c0_34 = arith.constant 0 : index
      %38 = vector.load %arg9[%c0_33, %c0_34] : memref<2x16xf32, #tpu.memory_space<vmem>>, vector<2x16xf32>
      tpu.vector_store %arg9[%c0_33, %c0_34], %37 {strides = array<i32>} : memref<2x16xf32, #tpu.memory_space<vmem>>, vector<2x16xf32>,
      %cst_35 = arith.constant 0.000000e+00 : f32
      %39 = vector.broadcast %cst_35 : f32 to vector<2x16xf32>
      %c0_36 = arith.constant 0 : index
      %c0_37 = arith.constant 0 : index
      %40 = vector.load %arg10[%c0_36, %c0_37] : memref<2x16xf32, #tpu.memory_space<vmem>>, vector<2x16xf32>
      tpu.vector_store %arg10[%c0_36, %c0_37], %39 {strides = array<i32>} : memref<2x16xf32, #tpu.memory_space<vmem>>, vector<2x16xf32>,
      %cst_38 = arith.constant 0.000000e+00 : f32
      %41 = vector.broadcast %cst_38 : f32 to vector<2x16xf32>
      %c0_39 = arith.constant 0 : index
      %c0_40 = arith.constant 0 : index
      %42 = vector.load %arg11[%c0_39, %c0_40] : memref<2x16xf32, #tpu.memory_space<vmem>>, vector<2x16xf32>
      tpu.vector_store %arg11[%c0_39, %c0_40], %41 {strides = array<i32>} : memref<2x16xf32, #tpu.memory_space<vmem>>, vector<2x16xf32>,
    } else {
    }
    %c0 = arith.constant 0 : index
    %c0_1 = arith.constant 0 : index
    %c0_2 = arith.constant 0 : index
    %3 = vector.load %arg2[%c0, %c0_1, %c0_2] : memref<2x8x32xf32, #tpu.memory_space<vmem>>, vector<2x8x32xf32>
    %4 = vector.shape_cast %3 : vector<2x8x32xf32> to vector<16x32xf32>
    %c0_3 = arith.constant 0 : index
    %c0_4 = arith.constant 0 : index
    %c0_5 = arith.constant 0 : index
    %5 = vector.load %arg3[%c0_3, %c0_4, %c0_5] : memref<2x8x32xf32, #tpu.memory_space<vmem>>, vector<2x8x32xf32>
    %6 = vector.shape_cast %5 : vector<2x8x32xf32> to vector<16x32xf32>
    %c0_6 = arith.constant 0 : index
    %c0_7 = arith.constant 0 : index
    %7 = vector.load %arg4[%c0_6, %c0_7] : memref<32x16xf32, #tpu.memory_space<vmem>>, vector<32x16xf32>
    %c0_8 = arith.constant 0 : index
    %c0_9 = arith.constant 0 : index
    %8 = vector.load %arg6[%c0_8, %c0_9] : memref<32x16xf32, #tpu.memory_space<vmem>>, vector<32x16xf32>
    %cst = arith.constant dense<0.000000e+00> : vector<16x16xf32>
    %9 = tpu.matmul %4, %7, %cst {dimension_numbers = #tpu.dot_dimension_numbers<[1], [0], [0], [1], [0, 0, 1, 1], [], []>} : vector<16x32xf32>, vector<32x16xf32>, vector<16x16xf32> -> vector<16x16xf32>
    %cst_10 = arith.constant dense<0.000000e+00> : vector<16x16xf32>
    %10 = tpu.matmul %6, %8, %cst_10 {dimension_numbers = #tpu.dot_dimension_numbers<[1], [0], [0], [1], [0, 0, 1, 1], [], []>} : vector<16x32xf32>, vector<32x16xf32>, vector<16x16xf32> -> vector<16x16xf32>
    %c0_11 = arith.constant 0 : index
    %c0_12 = arith.constant 0 : index
    %11 = vector.load %arg5[%c0_11, %c0_12] : memref<1x16xf32, #tpu.memory_space<vmem>>, vector<1x16xf32>
    %12 = vector.broadcast %11 : vector<1x16xf32> to vector<16x16xf32>
    %13 = arith.addf %9, %12 : vector<16x16xf32>
    %c0_13 = arith.constant 0 : index
    %c0_14 = arith.constant 0 : index
    %14 = vector.load %arg7[%c0_13, %c0_14] : memref<1x16xf32, #tpu.memory_space<vmem>>, vector<1x16xf32>
    %15 = vector.broadcast %14 : vector<1x16xf32> to vector<16x16xf32>
    %16 = arith.addf %10, %15 : vector<16x16xf32>
    %17 = vector.shape_cast %13 : vector<16x16xf32> to vector<2x8x16xf32>
    %18 = vector.shape_cast %16 : vector<16x16xf32> to vector<2x8x16xf32>
    %c0_15 = arith.constant 0 : index
    %c0_16 = arith.constant 0 : index
    %19 = vector.load %arg9[%c0_15, %c0_16] : memref<2x16xf32, #tpu.memory_space<vmem>>, vector<2x16xf32>
    %20 = arith.mulf %17, %18 : vector<2x8x16xf32>
    %cst_17 = arith.constant dense<0.000000e+00> : vector<2x16xf32>
    %21 = vector.multi_reduction <add>, %20, %cst_17 [1] : vector<2x8x16xf32> to vector<2x16xf32>
    %22 = arith.addf %19, %21 : vector<2x16xf32>
    %c0_18 = arith.constant 0 : index
    %c0_19 = arith.constant 0 : index
    %23 = vector.load %arg9[%c0_18, %c0_19] : memref<2x16xf32, #tpu.memory_space<vmem>>, vector<2x16xf32>
    tpu.vector_store %arg9[%c0_18, %c0_19], %22 {strides = array<i32>} : memref<2x16xf32, #tpu.memory_space<vmem>>, vector<2x16xf32>,
    %c0_20 = arith.constant 0 : index
    %c0_21 = arith.constant 0 : index
    %24 = vector.load %arg10[%c0_20, %c0_21] : memref<2x16xf32, #tpu.memory_space<vmem>>, vector<2x16xf32>
    %25 = arith.mulf %17, %17 : vector<2x8x16xf32>
    %cst_22 = arith.constant dense<0.000000e+00> : vector<2x16xf32>
    %26 = vector.multi_reduction <add>, %25, %cst_22 [1] : vector<2x8x16xf32> to vector<2x16xf32>
    %27 = arith.addf %24, %26 : vector<2x16xf32>
    %c0_23 = arith.constant 0 : index
    %c0_24 = arith.constant 0 : index
    %28 = vector.load %arg10[%c0_23, %c0_24] : memref<2x16xf32, #tpu.memory_space<vmem>>, vector<2x16xf32>
    tpu.vector_store %arg10[%c0_23, %c0_24], %27 {strides = array<i32>} : memref<2x16xf32, #tpu.memory_space<vmem>>, vector<2x16xf32>,
    %c0_25 = arith.constant 0 : index
    %c0_26 = arith.constant 0 : index
    %29 = vector.load %arg11[%c0_25, %c0_26] : memref<2x16xf32, #tpu.memory_space<vmem>>, vector<2x16xf32>
    %30 = arith.mulf %18, %18 : vector<2x8x16xf32>
    %cst_27 = arith.constant dense<0.000000e+00> : vector<2x16xf32>
    %31 = vector.multi_reduction <add>, %30, %cst_27 [1] : vector<2x8x16xf32> to vector<2x16xf32>
    %32 = arith.addf %29, %31 : vector<2x16xf32>
    %c0_28 = arith.constant 0 : index
    %c0_29 = arith.constant 0 : index
    %33 = vector.load %arg11[%c0_28, %c0_29] : memref<2x16xf32, #tpu.memory_space<vmem>>, vector<2x16xf32>
    tpu.vector_store %arg11[%c0_28, %c0_29], %32 {strides = array<i32>} : memref<2x16xf32, #tpu.memory_space<vmem>>, vector<2x16xf32>,
    %c0_i32_30 = arith.constant 0 : i32
    %34 = arith.cmpi eq, %arg1, %c0_i32_30 : i32
    %35 = arith.extui %34 : i1 to i32
    %c0_i32_31 = arith.constant 0 : i32
    %36 = arith.cmpi ne, %35, %c0_i32_31 : i32
    scf.if %36 {
      %c0_32 = arith.constant 0 : index
      %c0_33 = arith.constant 0 : index
      %37 = vector.load %arg9[%c0_32, %c0_33] : memref<2x16xf32, #tpu.memory_space<vmem>>, vector<2x16xf32>
      %cst_34 = arith.constant dense<0.000000e+00> : vector<2xf32>
      %38 = vector.multi_reduction <add>, %37, %cst_34 [1] : vector<2x16xf32> to vector<2xf32>
      %39 = vector.shape_cast %38 : vector<2xf32> to vector<2x1xf32>
      %c0_35 = arith.constant 0 : index
      %c0_36 = arith.constant 0 : index
      %40 = vector.load %arg10[%c0_35, %c0_36] : memref<2x16xf32, #tpu.memory_space<vmem>>, vector<2x16xf32>
      %cst_37 = arith.constant dense<0.000000e+00> : vector<2xf32>
      %41 = vector.multi_reduction <add>, %40, %cst_37 [1] : vector<2x16xf32> to vector<2xf32>
      %42 = vector.shape_cast %41 : vector<2xf32> to vector<2x1xf32>
      %c0_38 = arith.constant 0 : index
      %c0_39 = arith.constant 0 : index
      %43 = vector.load %arg11[%c0_38, %c0_39] : memref<2x16xf32, #tpu.memory_space<vmem>>, vector<2x16xf32>
      %cst_40 = arith.constant dense<0.000000e+00> : vector<2xf32>
      %44 = vector.multi_reduction <add>, %43, %cst_40 [1] : vector<2x16xf32> to vector<2xf32>
      %45 = vector.shape_cast %44 : vector<2xf32> to vector<2x1xf32>
      %46 = arith.mulf %42, %45 : vector<2x1xf32>
      %cst_41 = arith.constant 1.000000e-30 : f32
      %47 = vector.broadcast %cst_41 : f32 to vector<2x1xf32>
      %48 = arith.maximumf %46, %47 : vector<2x1xf32>
      %49 = math.rsqrt %48 : vector<2x1xf32>
      %50 = arith.mulf %39, %49 : vector<2x1xf32>
      %51 = vector.shape_cast %50 : vector<2x1xf32> to vector<2x1xf32>
      %52 = vector.broadcast %51 : vector<2x1xf32> to vector<2x128xf32>
      %c0_42 = arith.constant 0 : index
      %c0_43 = arith.constant 0 : index
      %53 = vector.load %arg8[%c0_42, %c0_43] : memref<2x128xf32, #tpu.memory_space<vmem>>, vector<2x128xf32>
      tpu.vector_store %arg8[%c0_42, %c0_43], %52 {strides = array<i32>} : memref<2x128xf32, #tpu.memory_space<vmem>>, vector<2x128xf32>,
    } else {
    }
    return
  }
  func.func @transform_0(%arg0: i32, %arg1: i32) -> (i32, i32, i32) {
    %c0_i32 = arith.constant 0 : i32
    %c0_i32_0 = arith.constant 0 : i32
    return %arg0, %arg1, %c0_i32 : i32, i32, i32
  }
  func.func @transform_1(%arg0: i32, %arg1: i32) -> (i32, i32, i32) {
    %c0_i32 = arith.constant 0 : i32
    %c0_i32_0 = arith.constant 0 : i32
    return %arg0, %arg1, %c0_i32 : i32, i32, i32
  }
  func.func @transform_2(%arg0: i32, %arg1: i32) -> (i32, i32) {
    %c0_i32 = arith.constant 0 : i32
    %c0_i32_0 = arith.constant 0 : i32
    %c0_i32_1 = arith.constant 0 : i32
    return %c0_i32, %c0_i32_0 : i32, i32
  }
  func.func @transform_3(%arg0: i32, %arg1: i32) -> (i32, i32) {
    %c0_i32 = arith.constant 0 : i32
    %c0_i32_0 = arith.constant 0 : i32
    %c0_i32_1 = arith.constant 0 : i32
    return %c0_i32, %c0_i32_0 : i32, i32
  }
  func.func @transform_4(%arg0: i32, %arg1: i32) -> (i32, i32) {
    %c0_i32 = arith.constant 0 : i32
    %c0_i32_0 = arith.constant 0 : i32
    %c0_i32_1 = arith.constant 0 : i32
    return %c0_i32, %c0_i32_0 : i32, i32
  }
  func.func @transform_5(%arg0: i32, %arg1: i32) -> (i32, i32) {
    %c0_i32 = arith.constant 0 : i32
    %c0_i32_0 = arith.constant 0 : i32
    %c0_i32_1 = arith.constant 0 : i32
    return %c0_i32, %c0_i32_0 : i32, i32
  }
  func.func @transform_6(%arg0: i32, %arg1: i32) -> (i32, i32) {
    %c0_i32 = arith.constant 0 : i32
    %c0_i32_0 = arith.constant 0 : i32
    return %arg0, %c0_i32 : i32, i32
  }
}

</mosaic_0001>

<llo_original>
// kernel: tpu_custom_call.1
$region0: #{tpu_custom_call.1}
  #allocation0 [shape = 'u32[]', space=smem, size = 0x4, offset = 0x4, fixed_abs, tag = 'smem constant byte address 0x4 - core index']
  #allocation1 [shape = 'u32[144,128]{1,0:T(1,128)}', space=vmem, size = 0x12000, scoped, tag = 'internal scratch']
  #allocation2 [shape = 'f32[2,16]{1,0:T(2,128)}', space=vmem, size = 0x400, scoped, tag = 'scratch operand']
  #allocation3 [shape = 'f32[2,16]{1,0:T(2,128)}', space=vmem, size = 0x400, scoped, tag = 'scratch operand']
  #allocation4 [shape = 'f32[2,16]{1,0:T(2,128)}', space=vmem, size = 0x400, scoped, tag = 'scratch operand']
  %s0 = inlined_call_operand.vmem [shape: f32[2,8,32], index: 0, kind: input, shape index: {}]
  %s1 = inlined_call_operand.vmem [shape: f32[2,8,32], index: 1, kind: input, shape index: {}]
  %s2 = inlined_call_operand.vmem [shape: f32[32,16], index: 2, kind: input, shape index: {}]
  %s3 = inlined_call_operand.vmem [shape: f32[1,16], index: 3, kind: input, shape index: {}]
  %s4 = inlined_call_operand.vmem [shape: f32[32,16], index: 4, kind: input, shape index: {}]
  %s5 = inlined_call_operand.vmem [shape: f32[1,16], index: 5, kind: input, shape index: {}]
  %s6 = inlined_call_operand.hbm [shape: f32[2,128], index: 6, kind: output, shape index: {}]
  %s7 = sld [smem:[#allocation0]]
  $region42: #{tpu_custom_call.1} parent=0
    _
  %s9 = ssub.s32 1, %s7
  %s10 = scalar_select 0, %s9, %s7
  $region1: #{tpu_custom_call.1} parent=0
    #allocation5 [shape = 'u8[1024]{0}', space=vmem, size = 0x400, scoped, tag = 'output window, operand 0, single buffered']
    #allocation6 [shape = 's32[1]{0}', space=sflag, size = 0x4, scoped, tag = 'scoped memory for tpu_custom_call.1']
    %11 = vsyncpa [#allocation6], 0
    // Predicated region
    $region2: #{tpu_custom_call.1} parent=1 // pred_check
      _
    $region3: #{tpu_custom_call.1} parent=1 // pred_check_branch
      %13 = sbr.rel (0) target = $region5
    $region4: #{tpu_custom_call.1} parent=1 // pred_region
      _
    $region5: #{tpu_custom_call.1} parent=1 // pred_fallthru
      _
    // Predicated region
    $region6: #{tpu_custom_call.1} parent=1 // pred_check
      _
    $region7: #{tpu_custom_call.1} parent=1 // pred_check_branch
      %15 = sbr.rel (0) target = $region9
    $region8: #{tpu_custom_call.1} parent=1 // pred_region
      _
    $region9: #{tpu_custom_call.1} parent=1 // pred_fallthru
      _
    // Predicated region
    $region10: #{tpu_custom_call.1} parent=1 // pred_check
      _
    $region11: #{tpu_custom_call.1} parent=1 // pred_check_branch
      %17 = sbr.rel (0) target = $region13
    $region12: #{tpu_custom_call.1} parent=1 // pred_region
      _
    $region13: #{tpu_custom_call.1} parent=1 // pred_fallthru
      _
    // Predicated region
    $region14: #{tpu_custom_call.1} parent=1 // pred_check
      _
    $region15: #{tpu_custom_call.1} parent=1 // pred_check_branch
      %19 = sbr.rel (0) target = $region17
    $region16: #{tpu_custom_call.1} parent=1 // pred_region
      _
    $region17: #{tpu_custom_call.1} parent=1 // pred_fallthru
      _
    // Predicated region
    $region18: #{tpu_custom_call.1} parent=1 // pred_check
      _
    $region19: #{tpu_custom_call.1} parent=1 // pred_check_branch
      %21 = sbr.rel (0) target = $region21
    $region20: #{tpu_custom_call.1} parent=1 // pred_region
      _
    $region21: #{tpu_custom_call.1} parent=1 // pred_fallthru
      _
    // Predicated region
    $region22: #{tpu_custom_call.1} parent=1 // pred_check
      _
    $region23: #{tpu_custom_call.1} parent=1 // pred_check_branch
      %23 = sbr.rel (0) target = $region25
    $region24: #{tpu_custom_call.1} parent=1 // pred_region
      _
    $region25: #{tpu_custom_call.1} parent=1 // pred_fallthru
      _
    %p24 = scmp.eq.s32.totalorder 0, 0
    // Predicated region
    $region26: #{tpu_custom_call.1} parent=1 // pred_check
      %p25 = pneg %p24
    $region27: #{tpu_custom_call.1} parent=1 // pred_check_branch
      %27 = sbr.rel (%p25) target = $region29
    $region28: #{tpu_custom_call.1} parent=1 // pred_region
      %vm28 = vcmask 123904
      %29 = vst.msk [vmem:[#allocation2] sm:$0x3] %vm28, 0.0
      %30 = vst.msk [vmem:[#allocation3] sm:$0x3] %vm28, 0.0
      %31 = vst.msk [vmem:[#allocation4] sm:$0x3] %vm28, 0.0
    $region29: #{tpu_custom_call.1} parent=1 // pred_fallthru
      _
    %v32 = vld [vmem:[%s0] sm:$0xff]
    %v33 = vld [vmem:[%s0 + $0x8] sm:$0xff]
    %v34 = vld [vmem:[%s1] sm:$0xff]
    %v35 = vld [vmem:[%s1 + $0x8] sm:$0xff]
    %v36 = vld [vmem:[%s2] sm:$0xff]
    %v37 = vld [vmem:[%s2 + $0x8] sm:$0xff]
    %v38 = vld [vmem:[%s2 + $0x10] sm:$0xff]
    %v39 = vld [vmem:[%s2 + $0x18] sm:$0xff]
    %v40 = vld [vmem:[%s4] sm:$0xff]
    %v41 = vld [vmem:[%s4 + $0x8] sm:$0xff]
    %v42 = vld [vmem:[%s4 + $0x10] sm:$0xff]
    %v43 = vld [vmem:[%s4 + $0x18] sm:$0xff]
    %v44 = vld [vmem:[%s3] sm:$0x1]
    %v46 = vlaneseq
    %v47 = vshrl.u32 %v46, 7
    %v48 = vsub.s32 0, %v47
    %v49 = vrot.slane %v44, %v48
    %vm51 = vcmask 261120
    %v53 = vsel %vm51, %v32, 0
    %v56 = vsel %vm51, %v33, 0
    %58 = vmatprep.subr.mxu0 0.0
    %59 = vmatpush1.msra.mxu0 %v36
    %60 = vmatprep.subr.mxu0 0.0
    %61 = vmatpush1.msra.mxu0 %v37
    %62 = vmatprep.subr.mxu0 0.0
    %63 = vmatpush1.msra.mxu0 %v38
    %64 = vmatprep.subr.mxu0 0.0
    %65 = vmatpush1.msra.mxu0 %v39
    %66 = vmatprep.subr.mxu0 0.0
    %67 = vmatpush1.msra.mxu0 0.0
    %68 = vmatprep.subr.mxu0 0.0
    %69 = vmatpush1.msra.mxu0 0.0
    %70 = vmatprep.subr.mxu0 0.0
    %71 = vmatpush1.msra.mxu0 0.0
    %72 = vmatprep.subr.mxu0 0.0
    %73 = vmatpush1.msra.mxu0 0.0
    %74 = vmatprep.subr.mxu0 0.0
    %75 = vmatpush1.msra.mxu0 0.0
    %76 = vmatprep.subr.mxu0 0.0
    %77 = vmatpush1.msra.mxu0 0.0
    %78 = vmatprep.subr.mxu0 0.0
    %79 = vmatpush1.msra.mxu0 0.0
    %80 = vmatprep.subr.mxu0 0.0
    %81 = vmatpush1.msra.mxu0 0.0
    %82 = vmatprep.subr.mxu0 0.0
    %83 = vmatpush1.msra.mxu0 0.0
    %84 = vmatprep.subr.mxu0 0.0
    %85 = vmatpush1.msra.mxu0 0.0
    %86 = vmatprep.subr.mxu0 0.0
    %87 = vmatpush1.msra.mxu0 0.0
    %88 = vmatprep.subr.mxu0 0.0
    %89 = vmatpush1.msra.mxu0 0.0
    %90 = vmatprep.subr.mxu0 0.0
    %91 = vmatpush1.msra.mxu0 0.0
    %92 = vmatprep.subr.mxu0 0.0
    %93 = vmatpush1.msra.mxu0 0.0
    %94 = vmatprep.subr.mxu0 0.0
    %95 = vmatpush1.msra.mxu0 0.0
    %96 = vmatprep.subr.mxu0 0.0
    %97 = vmatpush1.msra.mxu0 0.0
    %98 = vmatprep.subr.mxu0 0.0
    %99 = vmatpush1.msra.mxu0 0.0
    %100 = vmatprep.subr.mxu0 0.0
    %101 = vmatpush1.msra.mxu0 0.0
    %102 = vmatprep.subr.mxu0 0.0
    %103 = vmatpush1.msra.mxu0 0.0
    %104 = vmatprep.subr.mxu0 0.0
    %105 = vmatpush1.msra.mxu0 0.0
    %106 = vmatprep.subr.mxu0 0.0
    %107 = vmatpush1.msra.mxu0 0.0
    %108 = vmatprep.subr.mxu0 0.0
    %109 = vmatpush1.msra.mxu0 0.0
    %110 = vmatprep.subr.mxu0 0.0
    %111 = vmatpush1.msra.mxu0 0.0
    %112 = vmatprep.subr.mxu0 0.0
    %113 = vmatpush1.msra.mxu0 0.0
    %114 = vmatprep.subr.mxu0 0.0
    %115 = vmatpush1.msra.mxu0 0.0
    %116 = vmatprep.subr.mxu0 0.0
    %117 = vmatpush1.msra.mxu0 0.0
    %118 = vmatprep.subr.mxu0 0.0
    %119 = vmatpush1.msra.mxu0 0.0
    %120 = vmatprep.subr.mxu0 0.0
    %121 = vmatpush1.msra.mxu0 0.0
    %122 = vmatprep.mubr.f32.mxu0 0.0
    %123 = vmatmul.mubr.f32.gmra.mrb[0].mxu0 %v53
    %v124 = vpop.f32.mrb[0].mxu0
    %v125 = vadd.f32 %v49, %v124
    %v126 = vpop.f32.mrb[0].mxu0
    %127 = vmatprep.mubr.f32.mxu0 0.0
    %128 = vmatmul.mubr.f32.gmra.mrb[0].mxu0 %v56
    %v129 = vpop.f32.mrb[0].mxu0
    %v130 = vadd.f32 %v49, %v129
    %v131 = vpop.f32.mrb[0].mxu0
    %132 = vdwg.mxu0
    %v133 = vld [vmem:[%s5] sm:$0x1]
    %v135 = vlaneseq
    %v136 = vshrl.u32 %v135, 7
    %v137 = vsub.s32 0, %v136
    %v138 = vrot.slane %v133, %v137
    %v141 = vsel %vm51, %v34, 0
    %v144 = vsel %vm51, %v35, 0
    %146 = vmatprep.subr.mxu0 0.0
    %147 = vmatpush1.msra.mxu0 %v40
    %148 = vmatprep.subr.mxu0 0.0
    %149 = vmatpush1.msra.mxu0 %v41
    %150 = vmatprep.subr.mxu0 0.0
    %151 = vmatpush1.msra.mxu0 %v42
    %152 = vmatprep.subr.mxu0 0.0
    %153 = vmatpush1.msra.mxu0 %v43
    %154 = vmatprep.subr.mxu0 0.0
    %155 = vmatpush1.msra.mxu0 0.0
    %156 = vmatprep.subr.mxu0 0.0
    %157 = vmatpush1.msra.mxu0 0.0
    %158 = vmatprep.subr.mxu0 0.0
    %159 = vmatpush1.msra.mxu0 0.0
    %160 = vmatprep.subr.mxu0 0.0
    %161 = vmatpush1.msra.mxu0 0.0
    %162 = vmatprep.subr.mxu0 0.0
    %163 = vmatpush1.msra.mxu0 0.0
    %164 = vmatprep.subr.mxu0 0.0
    %165 = vmatpush1.msra.mxu0 0.0
    %166 = vmatprep.subr.mxu0 0.0
    %167 = vmatpush1.msra.mxu0 0.0
    %168 = vmatprep.subr.mxu0 0.0
    %169 = vmatpush1.msra.mxu0 0.0
    %170 = vmatprep.subr.mxu0 0.0
    %171 = vmatpush1.msra.mxu0 0.0
    %172 = vmatprep.subr.mxu0 0.0
    %173 = vmatpush1.msra.mxu0 0.0
    %174 = vmatprep.subr.mxu0 0.0
    %175 = vmatpush1.msra.mxu0 0.0
    %176 = vmatprep.subr.mxu0 0.0
    %177 = vmatpush1.msra.mxu0 0.0
    %178 = vmatprep.subr.mxu0 0.0
    %179 = vmatpush1.msra.mxu0 0.0
    %180 = vmatprep.subr.mxu0 0.0
    %181 = vmatpush1.msra.mxu0 0.0
    %182 = vmatprep.subr.mxu0 0.0
    %183 = vmatpush1.msra.mxu0 0.0
    %184 = vmatprep.subr.mxu0 0.0
    %185 = vmatpush1.msra.mxu0 0.0
    %186 = vmatprep.subr.mxu0 0.0
    %187 = vmatpush1.msra.mxu0 0.0
    %188 = vmatprep.subr.mxu0 0.0
    %189 = vmatpush1.msra.mxu0 0.0
    %190 = vmatprep.subr.mxu0 0.0
    %191 = vmatpush1.msra.mxu0 0.0
    %192 = vmatprep.subr.mxu0 0.0
    %193 = vmatpush1.msra.mxu0 0.0
    %194 = vmatprep.subr.mxu0 0.0
    %195 = vmatpush1.msra.mxu0 0.0
    %196 = vmatprep.subr.mxu0 0.0
    %197 = vmatpush1.msra.mxu0 0.0
    %198 = vmatprep.subr.mxu0 0.0
    %199 = vmatpush1.msra.mxu0 0.0
    %200 = vmatprep.subr.mxu0 0.0
    %201 = vmatpush1.msra.mxu0 0.0
    %202 = vmatprep.subr.mxu0 0.0
    %203 = vmatpush1.msra.mxu0 0.0
    %204 = vmatprep.subr.mxu0 0.0
    %205 = vmatpush1.msra.mxu0 0.0
    %206 = vmatprep.subr.mxu0 0.0
    %207 = vmatpush1.msra.mxu0 0.0
    %208 = vmatprep.subr.mxu0 0.0
    %209 = vmatpush1.msra.mxu0 0.0
    %210 = vmatprep.mubr.f32.mxu0 0.0
    %211 = vmatmul.mubr.f32.gmra.mrb[0].mxu0 %v141
    %v212 = vpop.f32.mrb[0].mxu0
    %v213 = vadd.f32 %v138, %v212
    %v214 = vpop.f32.mrb[0].mxu0
    %215 = vmatprep.mubr.f32.mxu0 0.0
    %216 = vmatmul.mubr.f32.gmra.mrb[0].mxu0 %v144
    %v217 = vpop.f32.mrb[0].mxu0
    %v218 = vadd.f32 %v138, %v217
    %v219 = vpop.f32.mrb[0].mxu0
    %220 = vdwg.mxu0
    %v221 = vld [vmem:[#allocation2] sm:$0x3]
    %v222 = vmul.f32 %v125, %v213
    %v223 = vmul.f32 %v130, %v218
    %vm224 = vcmask 130048
    %v225 = vsel %vm224, %v222, 0.0
    %v226 = vrot.slane %v225, 4
    %v227 = vadd.f32 %v225, %v226
    %v228 = vrot.slane %v227, 2
    %v229 = vadd.f32 %v227, %v228
    %v230 = vrot.slane %v229, 1
    %v231 = vadd.f32 %v229, %v230
    %v232 = vsel %vm224, %v223, 0.0
    %v233 = vrot.slane %v232, 4
    %v234 = vadd.f32 %v232, %v233
    %v235 = vrot.slane %v234, 2
    %v236 = vadd.f32 %v234, %v235
    %v237 = vrot.slane %v236, 1
    %v238 = vadd.f32 %v236, %v237
    %vm241 = vcmask 1041409
    %v242 = vsel %vm241, %v238, %v231
    %v244 = vadd.f32 %v221, %v242
    %vm245 = vcmask 123904
    %246 = vst.msk [vmem:[#allocation2] sm:$0x3] %vm245, %v244
    %v247 = vld [vmem:[#allocation3] sm:$0x3]
    %v248 = vmul.f32 %v125, %v125
    %v249 = vmul.f32 %v130, %v130
    %v250 = vsel %vm224, %v248, 0.0
    %v251 = vrot.slane %v250, 4
    %v252 = vadd.f32 %v250, %v251
    %v253 = vrot.slane %v252, 2
    %v254 = vadd.f32 %v252, %v253
    %v255 = vrot.slane %v254, 1
    %v256 = vadd.f32 %v254, %v255
    %v257 = vsel %vm224, %v249, 0.0
    %v258 = vrot.slane %v257, 4
    %v259 = vadd.f32 %v257, %v258
    %v260 = vrot.slane %v259, 2
    %v261 = vadd.f32 %v259, %v260
    %v262 = vrot.slane %v261, 1
    %v263 = vadd.f32 %v261, %v262
    %v266 = vsel %vm241, %v263, %v256
    %v268 = vadd.f32 %v247, %v266
    %269 = vst.msk [vmem:[#allocation3] sm:$0x3] %vm245, %v268
    %v270 = vld [vmem:[#allocation4] sm:$0x3]
    %v271 = vmul.f32 %v213, %v213
    %v272 = vmul.f32 %v218, %v218
    %v273 = vsel %vm224, %v271, 0.0
    %v274 = vrot.slane %v273, 4
    %v275 = vadd.f32 %v273, %v274
    %v276 = vrot.slane %v275, 2
    %v277 = vadd.f32 %v275, %v276
    %v278 = vrot.slane %v277, 1
    %v279 = vadd.f32 %v277, %v278
    %v280 = vsel %vm224, %v272, 0.0
    %v281 = vrot.slane %v280, 4
    %v282 = vadd.f32 %v280, %v281
    %v283 = vrot.slane %v282, 2
    %v284 = vadd.f32 %v282, %v283
    %v285 = vrot.slane %v284, 1
    %v286 = vadd.f32 %v284, %v285
    %v289 = vsel %vm241, %v286, %v279
    %v291 = vadd.f32 %v270, %v289
    %292 = vst.msk [vmem:[#allocation4] sm:$0x3] %vm245, %v291
    // Predicated region
    $region30: #{tpu_custom_call.1} parent=1 // pred_check
      %p293 = pneg %p24
    $region31: #{tpu_custom_call.1} parent=1 // pred_check_branch
      %295 = sbr.rel (%p293) target = $region33
    $region32: #{tpu_custom_call.1} parent=1 // pred_region
      %v296 = vld [vmem:[#allocation2] sm:$0x3]
      %v297 = vsel %vm245, %v296, 0.0
      %298 = vadd.xlane.f32.xlu0 %v297
      %v299 = vpop.xlane.xlu0 %298
      %v300 = vld [vmem:[#allocation3] sm:$0x3]
      %v301 = vsel %vm245, %v300, 0.0
      %302 = vadd.xlane.f32.xlu0 %v301
      %v303 = vpop.xlane.xlu0 %302
      %v304 = vld [vmem:[#allocation4] sm:$0x3]
      %v305 = vsel %vm245, %v304, 0.0
      %306 = vadd.xlane.f32.xlu0 %v305
      %v307 = vpop.xlane.xlu0 %306
      %v308 = vmul.f32 %v303, %v307
      %v309 = vmax.f32 %v308, 1e-30
      %v310 = vrsqrt.pop %v309
      %v311 = vmul.f32 %v299, %v310
      %312 = vst [vmem:[#allocation5] sm:$0x3] %v311
    $region33: #{tpu_custom_call.1} parent=1 // pred_fallthru
      _
    // Predicated region
    $region34: #{tpu_custom_call.1} parent=1 // pred_check
      _
    $region35: #{tpu_custom_call.1} parent=1 // pred_check_branch
      %314 = sbr.rel (0) target = $region37
    $region36: #{tpu_custom_call.1} parent=1 // pred_region
      %s316 = ssub.s32 32, 32
      %317 = vsyncadd [#allocation6], %s316
      %s319 = sshll.u32 [#allocation5], 4
      %s320 = int_to_ptr.vmem [resolvable:$true] %s319
      %322 = dma.vmem_to_hbm [thread:$0]  %s320, 32, %s6, [#allocation6]
    $region37: #{tpu_custom_call.1} parent=1 // pred_fallthru
      _
    // Predicated region
    $region38: #{tpu_custom_call.1} parent=1 // pred_check
      _
    $region39: #{tpu_custom_call.1} parent=1 // pred_check_branch
      %324 = sbr.rel (0) target = $region41
    $region40: #{tpu_custom_call.1} parent=1 // pred_region
      %325 = dma.done [#allocation6], 32
    $region41: #{tpu_custom_call.1} parent=1 // pred_fallthru
      _
    %326 = vsyncpa [#allocation6], 1

</llo_original>
